<compile_context>
chip_gen: v7x
topology: tpu7x:2x2x1
jax: 0.10.0
libtpu: 0.0.40
codegen_flags: <defaults>
</compile_context>

<pallas_src>
import jax
import jax.numpy as jnp
from jax import lax
from jax.experimental import pallas as pl
from jax.experimental.pallas import tpu as pltpu


def _round_up(x: int, m: int) -> int:
    return (x + m - 1) // m * m


# ----------------------------------------------------------------------------
# Pallas kernel: partials[i] holds the contribution of batch tile i to
#   loss = sum((o-t)^2) + gw*sum((g-t2)^2) + hw*sum((h-t3)^2)
# ----------------------------------------------------------------------------
def _make_loss_kernel(gradient_weight: float, hess_weight: float):
    gw = float(gradient_weight)
    hw = float(hess_weight)

    def loss_kernel(pred_ref, tgt_ref, grad_ref, tgt2_ref, hess_ref, tgt3_ref,
                    part_ref, acc_ref):
        # All program_id / num_programs calls live at the top level of the
        # kernel body (never inside a pl.when branch).
        j = pl.program_id(1)
        j_last = pl.num_programs(1) - 1

        # New batch tile -> reset the elementwise accumulator.
        @pl.when(j == 0)
        def _():
            acc_ref[...] = jnp.zeros_like(acc_ref)

        # Hot loop: lane-dense (tb, tf) tile of the Hessian stream; pure VPU.
        d2 = hess_ref[...] - tgt3_ref[...]
        acc_ref[...] += d2 * d2

        # Epilogue for this batch tile: one cross-sublane reduce, plus the tiny
        # (tb,1)/(tb,D) terms of this batch tile added exactly once.
        @pl.when(j == j_last)
        def _():
            tf = part_ref.shape[2]
            row = hw * jnp.sum(acc_ref[...], axis=0, keepdims=True)   # (1, tf)

            d0 = pred_ref[...] - tgt_ref[...]
            d1 = grad_ref[...] - tgt2_ref[...]
            small = jnp.sum(d0 * d0) + gw * jnp.sum(d1 * d1)          # scalar

            sub = lax.broadcasted_iota(jnp.int32, (8, tf), 0)
            lane = lax.broadcasted_iota(jnp.int32, (8, tf), 1)
            part8 = jnp.where(sub == 0, row, 0.0)                     # (8, tf)
            part8 = part8 + jnp.where((sub == 0) & (lane == 0), small, 0.0)
            part_ref[0] = part8

    return loss_kernel


def custom_loss_pallas(outputs, targets, gradients, targets2, hess_flat,
                       targets3, gradient_weight, hess_weight,
                       *, tb=128, tf=512):
    outputs = jnp.asarray(outputs, jnp.float32)
    targets = jnp.asarray(targets, jnp.float32)
    gradients = jnp.asarray(gradients, jnp.float32)
    targets2 = jnp.asarray(targets2, jnp.float32)
    hess_flat = jnp.asarray(hess_flat, jnp.float32)
    targets3 = jnp.asarray(targets3, jnp.float32)

    B, F = hess_flat.shape
    D = gradients.shape[1]

    # Sublane-aligned batch tiles, lane-dense feature tiles.
    tb = min(tb, _round_up(B, 8))
    tf = min(tf, _round_up(F, 128))
    b_pad = _round_up(B, tb)
    f_pad = _round_up(F, tf)

    # Zero-pad so every block is aligned; padded rows contribute (0-0)^2 == 0.
    hess_p = jnp.pad(hess_flat, ((0, b_pad - B), (0, f_pad - F)))
    tgt3_p = jnp.pad(targets3, ((0, b_pad - B), (0, f_pad - F)))
    out_p = jnp.pad(outputs, ((0, b_pad - B), (0, 0)))
    tgt_p = jnp.pad(targets, ((0, b_pad - B), (0, 0)))
    grad_p = jnp.pad(gradients, ((0, b_pad - B), (0, 0)))
    tgt2_p = jnp.pad(targets2, ((0, b_pad - B), (0, 0)))

    n_bt = b_pad // tb
    n_ft = f_pad // tf

    kernel = _make_loss_kernel(gradient_weight, hess_weight)

    grid_spec = pltpu.PrefetchScalarGridSpec(
        num_scalar_prefetch=0,
        grid=(n_bt, n_ft),                      # reduction (feature) axis last
        in_specs=[
            # Tiny terms: one block per batch tile, constant over the feature
            # axis -> fetched once per batch tile, VMEM-resident.
            pl.BlockSpec((tb, 1), lambda i, j: (i, 0)),
            pl.BlockSpec((tb, 1), lambda i, j: (i, 0)),
            pl.BlockSpec((tb, D), lambda i, j: (i, 0)),
            pl.BlockSpec((tb, D), lambda i, j: (i, 0)),
            # Dominant streams: tiled and auto-double-buffered.
            pl.BlockSpec((tb, tf), lambda i, j: (i, j)),
            pl.BlockSpec((tb, tf), lambda i, j: (i, j)),
        ],
        # One lane-dense (8, tf) partial tile per batch tile -> no masked
        # partial stores; batch axis shardable across TensorCores (v7x).
        out_specs=pl.BlockSpec((1, 8, tf), lambda i, j: (i, 0, 0)),
        scratch_shapes=[pltpu.VMEM((tb, tf), jnp.float32)],
    )

    partials = pl.pallas_call(
        kernel,
        out_shape=jax.ShapeDtypeStruct((n_bt, 8, tf), jnp.float32),
        grid_spec=grid_spec,
        compiler_params=pltpu.CompilerParams(
            dimension_semantics=("parallel", "arbitrary"),
            vmem_limit_bytes=32 * 1024 * 1024,
        ),
    )(out_p, tgt_p, grad_p, tgt2_p, hess_p, tgt3_p)

    # Tiny final reduction over (n_bt, 8, tf) partials.
    return jnp.sum(partials)


# ----------------------------------------------------------------------------
# A small deterministic model (MLP: D -> H -> 1, tanh) so that outputs,
# gradients and per-sample Hessians are well-defined (mirrors the PyTorch use
# where `model` maps one input vector to a scalar).
# ----------------------------------------------------------------------------
def init_model_params(key, d_in, hidden):
    k1, k2 = jax.random.split(key)
    w1 = jax.random.normal(k1, (d_in, hidden), jnp.float32) * 0.3
    b1 = jnp.zeros((hidden,), jnp.float32)
    w2 = jax.random.normal(k2, (hidden, 1), jnp.float32) * 0.3
    b2 = jnp.zeros((1,), jnp.float32)
    return (w1, b1, w2, b2)


def model_single(params, x):
    """x: (D,) -> scalar"""
    w1, b1, w2, b2 = params
    h = jnp.tanh(x @ w1 + b1)
    return (h @ w2 + b2)[0]


# ----------------------------------------------------------------------------
# Full CustomLoss.forward equivalent.
# ----------------------------------------------------------------------------
def custom_loss_forward(params, inputs, targets, targets2, targets3,
                        gradient_weight=1.0, hess_weight=1.0):
    # outputs = model(inputs)                                      -> (B, 1)
    outputs = jax.vmap(lambda x: model_single(params, x))(inputs)[:, None]

    # torch.autograd.grad(outputs, inputs, grad_outputs=ones)      -> (B, D)
    # TODO(synk): the autodiff itself (grad/hessian) is plain JAX, not Pallas.
    gradients = jax.vmap(jax.grad(lambda x: model_single(params, x)))(inputs)

    # vect_hess(model, inputs).flatten(1, 2)                       -> (B, D*D)
    hess = jax.vmap(jax.hessian(lambda x: model_single(params, x)))(inputs)
    hess_flat = hess.reshape(inputs.shape[0], -1)

    return custom_loss_pallas(
        outputs, targets, gradients, targets2, hess_flat, targets3,
        gradient_weight, hess_weight,
    )


if __name__ == "__main__":
    B, D, H = 2, 8, 32
    gradient_weight = 1.0
    hess_weight = 1.0   # matches `hess_weight = 1` in the reference script

    key = jax.random.PRNGKey(0)
    kp, k1, k2, k3, k4 = jax.random.split(key, 5)

    params = init_model_params(kp, D, H)
    inputs = jax.random.normal(k1, (B, D), jnp.float32)
    targets = jax.random.normal(k2, (B, 1), jnp.float32)
    targets2 = jax.random.normal(k3, (B, D), jnp.float32)
    targets3 = jax.random.normal(k4, (B, D * D), jnp.float32)

    loss = custom_loss_forward(params, inputs, targets, targets2, targets3,
                               gradient_weight, hess_weight)
    loss = jax.block_until_ready(loss)

    # Pure-JAX reference check of the full forward pass.
    outputs = jax.vmap(lambda x: model_single(params, x))(inputs)[:, None]
    grads = jax.vmap(jax.grad(lambda x: model_single(params, x)))(inputs)
    hessf = jax.vmap(jax.hessian(lambda x: model_single(params, x)))(inputs)
    hessf = hessf.reshape(B, -1)
    ref = (jnp.sum((outputs - targets) ** 2)
           + gradient_weight * jnp.sum((grads - targets2) ** 2)
           + hess_weight * jnp.sum((hessf - targets3) ** 2))
    assert jnp.allclose(loss, ref, rtol=1e-5, atol=1e-5), (loss, ref)

    print("KERNEL_OK")
</pallas_src>

<mosaic_0001>
module attributes {stable_mosaic.version = 11 : i64} {
  func.func @loss_kernel(%arg0: i32, %arg1: i32, %arg2: memref<8x1xf32, #tpu.memory_space<vmem>>, %arg3: memref<8x1xf32, #tpu.memory_space<vmem>>, %arg4: memref<8x8xf32, #tpu.memory_space<vmem>>, %arg5: memref<8x8xf32, #tpu.memory_space<vmem>>, %arg6: memref<8x128xf32, #tpu.memory_space<vmem>>, %arg7: memref<8x128xf32, #tpu.memory_space<vmem>>, %arg8: memref<1x8x128xf32, #tpu.memory_space<vmem>>, %arg9: memref<8x128xf32, #tpu.memory_space<vmem>>) attributes {dimension_semantics = [#tpu.dimension_semantics<parallel>, #tpu.dimension_semantics<arbitrary>], iteration_bounds = array<i64: 1, 1>, scalar_prefetch = 0 : i64, scratch_operands = 1 : i64, tpu.core_type = #tpu.core_type<tc>, window_params = [{transform_indices = @transform_0, window_bounds = array<i64: 8, 1>}, {transform_indices = @transform_1, window_bounds = array<i64: 8, 1>}, {transform_indices = @transform_2, window_bounds = array<i64: 8, 8>}, {transform_indices = @transform_3, window_bounds = array<i64: 8, 8>}, {transform_indices = @transform_4, window_bounds = array<i64: 8, 128>}, {transform_indices = @transform_5, window_bounds = array<i64: 8, 128>}, {transform_indices = @transform_6, window_bounds = array<i64: 1, 8, 128>}]} {
    %c0_i32 = arith.constant 0 : i32
    %0 = arith.cmpi eq, %arg1, %c0_i32 : i32
    %1 = arith.extui %0 : i1 to i32
    %c0_i32_0 = arith.constant 0 : i32
    %2 = arith.cmpi ne, %1, %c0_i32_0 : i32
    scf.if %2 {
      %cst = arith.constant 0.000000e+00 : f32
      %13 = vector.broadcast %cst : f32 to vector<8x128xf32>
      %c0_10 = arith.constant 0 : index
      %c0_11 = arith.constant 0 : index
      %14 = vector.load %arg9[%c0_10, %c0_11] : memref<8x128xf32, #tpu.memory_space<vmem>>, vector<8x128xf32>
      tpu.vector_store %arg9[%c0_10, %c0_11], %13 {strides = array<i32>} : memref<8x128xf32, #tpu.memory_space<vmem>>, vector<8x128xf32>,
    } else {
    }
    %c0 = arith.constant 0 : index
    %c0_1 = arith.constant 0 : index
    %3 = vector.load %arg6[%c0, %c0_1] : memref<8x128xf32, #tpu.memory_space<vmem>>, vector<8x128xf32>
    %c0_2 = arith.constant 0 : index
    %c0_3 = arith.constant 0 : index
    %4 = vector.load %arg7[%c0_2, %c0_3] : memref<8x128xf32, #tpu.memory_space<vmem>>, vector<8x128xf32>
    %5 = arith.subf %3, %4 : vector<8x128xf32>
    %c0_4 = arith.constant 0 : index
    %c0_5 = arith.constant 0 : index
    %6 = vector.load %arg9[%c0_4, %c0_5] : memref<8x128xf32, #tpu.memory_space<vmem>>, vector<8x128xf32>
    %7 = arith.mulf %5, %5 : vector<8x128xf32>
    %8 = arith.addf %6, %7 : vector<8x128xf32>
    %c0_6 = arith.constant 0 : index
    %c0_7 = arith.constant 0 : index
    %9 = vector.load %arg9[%c0_6, %c0_7] : memref<8x128xf32, #tpu.memory_space<vmem>>, vector<8x128xf32>
    tpu.vector_store %arg9[%c0_6, %c0_7], %8 {strides = array<i32>} : memref<8x128xf32, #tpu.memory_space<vmem>>, vector<8x128xf32>,
    %c0_i32_8 = arith.constant 0 : i32
    %10 = arith.cmpi eq, %arg1, %c0_i32_8 : i32
    %11 = arith.extui %10 : i1 to i32
    %c0_i32_9 = arith.constant 0 : i32
    %12 = arith.cmpi ne, %11, %c0_i32_9 : i32
    scf.if %12 {
      %c0_10 = arith.constant 0 : index
      %c0_11 = arith.constant 0 : index
      %13 = vector.load %arg9[%c0_10, %c0_11] : memref<8x128xf32, #tpu.memory_space<vmem>>, vector<8x128xf32>
      %cst = arith.constant dense<0.000000e+00> : vector<128xf32>
      %14 = vector.multi_reduction <add>, %13, %cst [0] : vector<8x128xf32> to vector<128xf32>
      %15 = vector.shape_cast %14 : vector<128xf32> to vector<1x128xf32>
      %cst_12 = arith.constant 1.000000e+00 : f32
      %16 = vector.broadcast %cst_12 : f32 to vector<1x128xf32>
      %17 = arith.mulf %16, %15 : vector<1x128xf32>
      %c0_13 = arith.constant 0 : index
      %c0_14 = arith.constant 0 : index
      %18 = vector.load %arg2[%c0_13, %c0_14] : memref<8x1xf32, #tpu.memory_space<vmem>>, vector<8x1xf32>
      %c0_15 = arith.constant 0 : index
      %c0_16 = arith.constant 0 : index
      %19 = vector.load %arg3[%c0_15, %c0_16] : memref<8x1xf32, #tpu.memory_space<vmem>>, vector<8x1xf32>
      %20 = arith.subf %18, %19 : vector<8x1xf32>
      %c0_17 = arith.constant 0 : index
      %c0_18 = arith.constant 0 : index
      %21 = vector.load %arg4[%c0_17, %c0_18] : memref<8x8xf32, #tpu.memory_space<vmem>>, vector<8x8xf32>
      %c0_19 = arith.constant 0 : index
      %c0_20 = arith.constant 0 : index
      %22 = vector.load %arg5[%c0_19, %c0_20] : memref<8x8xf32, #tpu.memory_space<vmem>>, vector<8x8xf32>
      %23 = arith.subf %21, %22 : vector<8x8xf32>
      %24 = arith.mulf %20, %20 : vector<8x1xf32>
      %25 = vector.shape_cast %24 : vector<8x1xf32> to vector<1x8x1xf32>
      %cst_21 = arith.constant dense<0.000000e+00> : vector<1xf32>
      %26 = vector.multi_reduction <add>, %25, %cst_21 [1, 2] : vector<1x8x1xf32> to vector<1xf32>
      %27 = vector.shape_cast %26 : vector<1xf32> to vector<1x1x1xf32>
      %28 = vector.extract %27[0, 0, 0] : f32 from vector<1x1x1xf32>
      %29 = arith.mulf %23, %23 : vector<8x8xf32>
      %30 = vector.shape_cast %29 : vector<8x8xf32> to vector<1x8x8xf32>
      %cst_22 = arith.constant dense<0.000000e+00> : vector<1xf32>
      %31 = vector.multi_reduction <add>, %30, %cst_22 [1, 2] : vector<1x8x8xf32> to vector<1xf32>
      %32 = vector.shape_cast %31 : vector<1xf32> to vector<1x1x1xf32>
      %33 = vector.extract %32[0, 0, 0] : f32 from vector<1x1x1xf32>
      %cst_23 = arith.constant 1.000000e+00 : f32
      %34 = arith.mulf %cst_23, %33 : f32
      %35 = arith.addf %28, %34 : f32
      %36 = tpu.iota {dimensions = array<i32: 0>} : vector<8x128xi32>
      %37 = tpu.iota {dimensions = array<i32: 1>} : vector<8x128xi32>
      %c0_i32_24 = arith.constant 0 : i32
      %38 = vector.broadcast %c0_i32_24 : i32 to vector<8x128xi32>
      %39 = arith.cmpi eq, %36, %38 : vector<8x128xi32>
      %cst_25 = arith.constant 0.000000e+00 : f32
      %40 = vector.shape_cast %17 : vector<1x128xf32> to vector<1x128xf32>
      %41 = vector.broadcast %40 : vector<1x128xf32> to vector<8x128xf32>
      %42 = vector.broadcast %cst_25 : f32 to vector<8x128xf32>
      %43 = arith.select %39, %41, %42 : vector<8x128xi1>, vector<8x128xf32>
      %c0_i32_26 = arith.constant 0 : i32
      %44 = vector.broadcast %c0_i32_26 : i32 to vector<8x128xi32>
      %45 = arith.cmpi eq, %36, %44 : vector<8x128xi32>
      %c0_i32_27 = arith.constant 0 : i32
      %46 = vector.broadcast %c0_i32_27 : i32 to vector<8x128xi32>
      %47 = arith.cmpi eq, %37, %46 : vector<8x128xi32>
      %48 = arith.andi %45, %47 : vector<8x128xi1>
      %cst_28 = arith.constant 0.000000e+00 : f32
      %49 = vector.broadcast %35 : f32 to vector<8x128xf32>
      %50 = vector.broadcast %cst_28 : f32 to vector<8x128xf32>
      %51 = arith.select %48, %49, %50 : vector<8x128xi1>, vector<8x128xf32>
      %52 = arith.addf %43, %51 : vector<8x128xf32>
      %c0_29 = arith.constant 0 : index
      %c0_30 = arith.constant 0 : index
      %c0_31 = arith.constant 0 : index
      %53 = vector.load %arg8[%c0_29, %c0_30, %c0_31] : memref<1x8x128xf32, #tpu.memory_space<vmem>>, vector<1x8x128xf32>
      %54 = vector.shape_cast %53 : vector<1x8x128xf32> to vector<8x128xf32>
      %55 = vector.shape_cast %52 : vector<8x128xf32> to vector<1x8x128xf32>
      tpu.vector_store %arg8[%c0_29, %c0_30, %c0_31], %55 {strides = array<i32>} : memref<1x8x128xf32, #tpu.memory_space<vmem>>, vector<1x8x128xf32>,
    } else {
    }
    return
  }
  func.func @transform_0(%arg0: i32, %arg1: i32) -> (i32, i32) {
    %c0_i32 = arith.constant 0 : i32
    %c0_i32_0 = arith.constant 0 : i32
    return %arg0, %c0_i32 : i32, i32
  }
  func.func @transform_1(%arg0: i32, %arg1: i32) -> (i32, i32) {
    %c0_i32 = arith.constant 0 : i32
    %c0_i32_0 = arith.constant 0 : i32
    return %arg0, %c0_i32 : i32, i32
  }
  func.func @transform_2(%arg0: i32, %arg1: i32) -> (i32, i32) {
    %c0_i32 = arith.constant 0 : i32
    %c0_i32_0 = arith.constant 0 : i32
    return %arg0, %c0_i32 : i32, i32
  }
  func.func @transform_3(%arg0: i32, %arg1: i32) -> (i32, i32) {
    %c0_i32 = arith.constant 0 : i32
    %c0_i32_0 = arith.constant 0 : i32
    return %arg0, %c0_i32 : i32, i32
  }
  func.func @transform_4(%arg0: i32, %arg1: i32) -> (i32, i32) {
    %c0_i32 = arith.constant 0 : i32
    return %arg0, %arg1 : i32, i32
  }
  func.func @transform_5(%arg0: i32, %arg1: i32) -> (i32, i32) {
    %c0_i32 = arith.constant 0 : i32
    return %arg0, %arg1 : i32, i32
  }
  func.func @transform_6(%arg0: i32, %arg1: i32) -> (i32, i32, i32) {
    %c0_i32 = arith.constant 0 : i32
    %c0_i32_0 = arith.constant 0 : i32
    %c0_i32_1 = arith.constant 0 : i32
    return %arg0, %c0_i32, %c0_i32_0 : i32, i32, i32
  }
}

</mosaic_0001>

<llo_original>
// kernel: tpu_custom_call.1
$region0: #{tpu_custom_call.1}
  #allocation0 [shape = 'u32[]', space=smem, size = 0x4, offset = 0x4, fixed_abs, tag = 'smem constant byte address 0x4 - core index']
  #allocation1 [shape = 'u32[144,128]{1,0:T(1,128)}', space=vmem, size = 0x12000, scoped, tag = 'internal scratch']
  #allocation2 [shape = 'f32[8,128]{1,0:T(8,128)}', space=vmem, size = 0x1000, scoped, tag = 'scratch operand']
  %s0 = inlined_call_operand.vmem [shape: f32[8,1], index: 0, kind: input, shape index: {}]
  %s1 = inlined_call_operand.vmem [shape: f32[8,1], index: 1, kind: input, shape index: {}]
  %s2 = inlined_call_operand.vmem [shape: f32[8,8], index: 2, kind: input, shape index: {}]
  %s3 = inlined_call_operand.vmem [shape: f32[8,8], index: 3, kind: input, shape index: {}]
  %s4 = inlined_call_operand.vmem [shape: f32[8,128], index: 4, kind: input, shape index: {}]
  %s5 = inlined_call_operand.vmem [shape: f32[8,128], index: 5, kind: input, shape index: {}]
  %s6 = inlined_call_operand.hbm [shape: f32[1,8,128], index: 6, kind: output, shape index: {}]
  %s7 = sld [smem:[#allocation0]]
  $region42: #{tpu_custom_call.1} parent=0
    _
  %s9 = ssub.s32 1, %s7
  %s10 = scalar_select 0, %s9, %s7
  $region1: #{tpu_custom_call.1} parent=0
    #allocation3 [shape = 'u8[4096]{0}', space=vmem, size = 0x1000, scoped, tag = 'output window, operand 0, single buffered']
    #allocation4 [shape = 's32[1]{0}', space=sflag, size = 0x4, scoped, tag = 'scoped memory for tpu_custom_call.1']
    %11 = vsyncpa [#allocation4], 0
    // Predicated region
    $region2: #{tpu_custom_call.1} parent=1 // pred_check
      _
    $region3: #{tpu_custom_call.1} parent=1 // pred_check_branch
      %13 = sbr.rel (0) target = $region5
    $region4: #{tpu_custom_call.1} parent=1 // pred_region
      _
    $region5: #{tpu_custom_call.1} parent=1 // pred_fallthru
      _
    // Predicated region
    $region6: #{tpu_custom_call.1} parent=1 // pred_check
      _
    $region7: #{tpu_custom_call.1} parent=1 // pred_check_branch
      %15 = sbr.rel (0) target = $region9
    $region8: #{tpu_custom_call.1} parent=1 // pred_region
      _
    $region9: #{tpu_custom_call.1} parent=1 // pred_fallthru
      _
    // Predicated region
    $region10: #{tpu_custom_call.1} parent=1 // pred_check
      _
    $region11: #{tpu_custom_call.1} parent=1 // pred_check_branch
      %17 = sbr.rel (0) target = $region13
    $region12: #{tpu_custom_call.1} parent=1 // pred_region
      _
    $region13: #{tpu_custom_call.1} parent=1 // pred_fallthru
      _
    // Predicated region
    $region14: #{tpu_custom_call.1} parent=1 // pred_check
      _
    $region15: #{tpu_custom_call.1} parent=1 // pred_check_branch
      %19 = sbr.rel (0) target = $region17
    $region16: #{tpu_custom_call.1} parent=1 // pred_region
      _
    $region17: #{tpu_custom_call.1} parent=1 // pred_fallthru
      _
    // Predicated region
    $region18: #{tpu_custom_call.1} parent=1 // pred_check
      _
    $region19: #{tpu_custom_call.1} parent=1 // pred_check_branch
      %21 = sbr.rel (0) target = $region21
    $region20: #{tpu_custom_call.1} parent=1 // pred_region
      _
    $region21: #{tpu_custom_call.1} parent=1 // pred_fallthru
      _
    // Predicated region
    $region22: #{tpu_custom_call.1} parent=1 // pred_check
      _
    $region23: #{tpu_custom_call.1} parent=1 // pred_check_branch
      %23 = sbr.rel (0) target = $region25
    $region24: #{tpu_custom_call.1} parent=1 // pred_region
      _
    $region25: #{tpu_custom_call.1} parent=1 // pred_fallthru
      _
    %p24 = scmp.eq.s32.totalorder 0, 0
    // Predicated region
    $region26: #{tpu_custom_call.1} parent=1 // pred_check
      %p25 = pneg %p24
    $region27: #{tpu_custom_call.1} parent=1 // pred_check_branch
      %27 = sbr.rel (%p25) target = $region29
    $region28: #{tpu_custom_call.1} parent=1 // pred_region
      %28 = vst [vmem:[#allocation2] sm:$0xff] 0.0
    $region29: #{tpu_custom_call.1} parent=1 // pred_fallthru
      _
    %v29 = vld [vmem:[%s4] sm:$0xff]
    %v30 = vld [vmem:[%s5] sm:$0xff]
    %v31 = vsub.f32 %v29, %v30
    %v32 = vld [vmem:[#allocation2] sm:$0xff]
    %v33 = vmul.f32 %v31, %v31
    %v34 = vadd.f32 %v32, %v33
    %35 = vst [vmem:[#allocation2] sm:$0xff] %v34
    // Predicated region
    $region30: #{tpu_custom_call.1} parent=1 // pred_check
      %p36 = pneg %p24
    $region31: #{tpu_custom_call.1} parent=1 // pred_check_branch
      %38 = sbr.rel (%p36) target = $region33
    $region32: #{tpu_custom_call.1} parent=1 // pred_region
      %v39 = vld [vmem:[#allocation2] sm:$0xff]
      %v40 = vrot.slane %v39, 4
      %v41 = vadd.f32 %v39, %v40
      %v42 = vrot.slane %v41, 2
      %v43 = vadd.f32 %v41, %v42
      %v44 = vrot.slane %v43, 1
      %v45 = vadd.f32 %v43, %v44
      %v46 = vld [vmem:[%s0] sm:$0xff]
      %v47 = vld [vmem:[%s1] sm:$0xff]
      %v48 = vsub.f32 %v46, %v47
      %v49 = vld [vmem:[%s2] sm:$0xff]
      %v50 = vld [vmem:[%s3] sm:$0xff]
      %v51 = vsub.f32 %v49, %v50
      %v52 = vmul.f32 %v48, %v48
      %vm53 = vcmask 7168
      %v54 = vsel %vm53, %v52, 0.0
      %55 = vadd.xlane.f32.xlu0 %v54
      %v56 = vpop.xlane.xlu0 %55
      %v57 = vrot.slane %v56, 4
      %v58 = vadd.f32 %v56, %v57
      %v59 = vrot.slane %v58, 2
      %v60 = vadd.f32 %v58, %v59
      %v61 = vrot.slane %v60, 1
      %v62 = vadd.f32 %v60, %v61
      %s63 = vtos %v62
      %v64 = vmul.f32 %v51, %v51
      %vm65 = vcmask 64512
      %v66 = vsel %vm65, %v64, 0.0
      %67 = vadd.xlane.f32.xlu0 %v66
      %v68 = vpop.xlane.xlu0 %67
      %v69 = vrot.slane %v68, 4
      %v70 = vadd.f32 %v68, %v69
      %v71 = vrot.slane %v70, 2
      %v72 = vadd.f32 %v70, %v71
      %v73 = vrot.slane %v72, 1
      %v74 = vadd.f32 %v72, %v73
      %s75 = vtos %v74
      %s76 = sadd.f32 %s63, %s75
      %v77 = vlaneseq
      %v78 = vshrl.u32 %v77, 7
      %v79 = vlaneseq
      %v80 = vand.u32 %v79, 127
      %vm81 = vcmp.eq.s32.totalorder %v78, 0
      %v82 = vsel %vm81, %v45, 0.0
      %vm83 = vcmp.eq.s32.totalorder %v80, 0
      %vm84 = vmand %vm81, %vm83
      %v85 = vstv %s76
      %v86 = vsel %vm84, %v85, 0.0
      %v87 = vadd.f32 %v82, %v86
      %88 = vst [vmem:[#allocation3] sm:$0xff] %v87
    $region33: #{tpu_custom_call.1} parent=1 // pred_fallthru
      _
    // Predicated region
    $region34: #{tpu_custom_call.1} parent=1 // pred_check
      _
    $region35: #{tpu_custom_call.1} parent=1 // pred_check_branch
      %90 = sbr.rel (0) target = $region37
    $region36: #{tpu_custom_call.1} parent=1 // pred_region
      %s92 = ssub.s32 128, 128
      %93 = vsyncadd [#allocation4], %s92
      %s95 = sshll.u32 [#allocation3], 4
      %s96 = int_to_ptr.vmem [resolvable:$true] %s95
      %98 = dma.vmem_to_hbm [thread:$0]  %s96, 128, %s6, [#allocation4]
    $region37: #{tpu_custom_call.1} parent=1 // pred_fallthru
      _
    // Predicated region
    $region38: #{tpu_custom_call.1} parent=1 // pred_check
      _
    $region39: #{tpu_custom_call.1} parent=1 // pred_check_branch
      %100 = sbr.rel (0) target = $region41
    $region40: #{tpu_custom_call.1} parent=1 // pred_region
      %101 = dma.done [#allocation4], 128
    $region41: #{tpu_custom_call.1} parent=1 // pred_fallthru
      _
    %102 = vsyncpa [#allocation4], 1

</llo_original>
